<compile_context>
chip_gen: v5e
topology: v5e:2x2
jax: 0.10.0
libtpu: 0.0.40
codegen_flags: <defaults>
</compile_context>

<pallas_src>
import math
from functools import partial

import jax
import jax.numpy as jnp
from jax import lax
from jax.experimental import pallas as pl
from jax.experimental.pallas import tpu as pltpu

num_bond_direction = 3
num_bond_type = 6
num_atom_type = 35
num_chirality_tag = 3


# --------------------------------------------------------------------------
# Pallas kernel: all GraphSAGE layers fused (propagate + normalize + BN [+ ReLU])
# --------------------------------------------------------------------------
def fused_sage_kernel(p_ref, h0_ref, b_ref, o_ref, h_scr, *, n_valid, num_layer):
    l = pl.program_id(0)

    # Load the initial node embeddings into the layer-carried scratch at layer 0.
    @pl.when(l == 0)
    def _():
        h_scr[...] = h0_ref[...]

    # ---- aggregate: agg = P @ h + B[l]  (bf16 operands, fp32 MXU accumulation) ----
    agg = jnp.dot(p_ref[...], h_scr[...], preferred_element_type=jnp.float32)
    agg = agg + b_ref[...].astype(jnp.float32)

    # ---- F.normalize(aggr_out, p=2, dim=-1): x / max(||x||_2, 1e-12)  (EUP rsqrt) ----
    ss = jnp.sum(agg * agg, axis=-1, keepdims=True)
    y = agg * lax.rsqrt(jnp.maximum(ss, 1e-24))

    # ---- BatchNorm1d (training-mode batch statistics over the VALID rows only) ----
    npad, dpad = y.shape
    mask = (lax.broadcasted_iota(jnp.int32, (npad, dpad), 0) < n_valid).astype(jnp.float32)
    y = y * mask
    inv_n = 1.0 / n_valid
    mean = jnp.sum(y, axis=0, keepdims=True) * inv_n
    diff = (y - mean) * mask
    var = jnp.sum(diff * diff, axis=0, keepdims=True) * inv_n
    y = (y - mean) * lax.rsqrt(var + 1e-5)

    # ReLU on all layers except the last; dropout(p=0) is the identity.
    y = jnp.where((l < num_layer - 1) & (y < 0.0), 0.0, y)
    y = y * mask  # keep padded rows at exactly zero for the next layer's matmul

    # Carry H to the next layer in bf16 (feeds the bf16 MXU path again).
    h_scr[...] = y.astype(h_scr.dtype)

    # JK == 'last': only the final layer's result is the output.
    @pl.when(l == num_layer - 1)
    def _():
        o_ref[...] = y


def fused_sage_layers(P, H0, B_stack, *, n_valid):
    """P: [Np, Np] bf16 (resident), H0: [Np, Dp] bf16, B_stack: [L, Np, Dp] bf16."""
    num_layer, N_pad, D_pad = B_stack.shape
    kernel = partial(fused_sage_kernel, n_valid=n_valid, num_layer=num_layer)
    return pl.pallas_call(
        kernel,
        out_shape=jax.ShapeDtypeStruct((N_pad, D_pad), jnp.float32),
        grid_spec=pltpu.PrefetchScalarGridSpec(
            num_scalar_prefetch=0,
            grid=(num_layer,),
            in_specs=[
                # P: same block every layer -> DMA'd once, stays VMEM-resident.
                pl.BlockSpec((N_pad, N_pad), lambda l: (0, 0)),
                # H0: only read at layer 0, also resident (no re-DMA).
                pl.BlockSpec((N_pad, D_pad), lambda l: (0, 0)),
                # Per-layer bias slab, double-buffered across the layer loop.
                pl.BlockSpec((None, N_pad, D_pad), lambda l: (l, 0, 0)),
            ],
            out_specs=pl.BlockSpec((N_pad, D_pad), lambda l: (0, 0)),
            scratch_shapes=[pltpu.VMEM((N_pad, D_pad), jnp.bfloat16)],
        ),
        compiler_params=pltpu.CompilerParams(
            dimension_semantics=("arbitrary",),      # layer loop is a sequential dependency
            vmem_limit_bytes=48 * 1024 * 1024,       # > 32 MiB default, < v7x 64 MiB physical
        ),
    )(P, H0, B_stack)


# --------------------------------------------------------------------------
# Parameter init (deterministic xavier_uniform, as in the PyTorch module)
# --------------------------------------------------------------------------
def xavier_uniform(key, shape):
    fan_out, fan_in = shape
    a = math.sqrt(6.0 / (fan_in + fan_out))
    return jax.random.uniform(key, shape, minval=-a, maxval=a, dtype=jnp.float32)


def init_params(key, num_layer, emb_dim):
    keys = jax.random.split(key, 2 + 2 * num_layer)
    params = {
        "x_embedding1": xavier_uniform(keys[0], (num_atom_type, emb_dim)),
        "x_embedding2": xavier_uniform(keys[1], (num_chirality_tag, emb_dim)),
        "layers": [],
    }
    for l in range(num_layer):
        params["layers"].append({
            "edge_embedding1": xavier_uniform(keys[2 + 2 * l], (num_bond_type, emb_dim)),
            "edge_embedding2": xavier_uniform(keys[3 + 2 * l], (num_bond_direction, emb_dim)),
            # NOTE: GraphSAGE.__init__ also creates `self.linear`, but forward() never uses it.
        })
    return params


# --------------------------------------------------------------------------
# GNNEncoder forward: glue in JAX (O(E) scatters), hot path in the fused Pallas kernel
# --------------------------------------------------------------------------
def _pad_to(n, m):
    return max(m, ((n + m - 1) // m) * m)


def _with_self_loops(edge_index, edge_attr, N):
    loop = jnp.arange(N, dtype=edge_index.dtype)
    src = jnp.concatenate([edge_index[0], loop])
    dst = jnp.concatenate([edge_index[1], loop])
    self_loop_attr = jnp.concatenate(
        [jnp.full((N, 1), 4, dtype=edge_attr.dtype),
         jnp.zeros((N, 1), dtype=edge_attr.dtype)], axis=1)
    edge_attr_full = jnp.concatenate([edge_attr, self_loop_attr], axis=0)
    return src, dst, edge_attr_full


def gnn_encoder_forward(params, x, edge_index, edge_attr):
    N = x.shape[0]
    D = params["x_embedding1"].shape[1]
    num_layer = len(params["layers"])
    N_pad = _pad_to(N, 128)
    D_pad = _pad_to(D, 128)

    src, dst, edge_attr_full = _with_self_loops(edge_index, edge_attr, N)

    # Mean-aggregation operator P (layer-invariant) via O(E) scatter-add (no dense one-hot).
    deg = jnp.zeros((N_pad,), jnp.float32).at[dst].add(1.0)       # incl. self loop -> >=1 on valid rows
    inv_deg = jnp.where(deg > 0, 1.0 / deg, 0.0)
    P = jnp.zeros((N_pad, N_pad), jnp.float32).at[dst, src].add(1.0) * inv_deg[:, None]

    # Initial node embeddings, padded.
    h0 = (jnp.take(params["x_embedding1"], x[:, 0], axis=0)
          + jnp.take(params["x_embedding2"], x[:, 1], axis=0)).astype(jnp.float32)
    h0 = jnp.zeros((N_pad, D_pad), jnp.float32).at[:N, :D].set(h0)

    # Per-layer mean edge-embedding bias B[l] via O(E*D) scatter-add, stacked to [L, Np, Dp].
    biases = []
    for lp in params["layers"]:
        edge_emb = (jnp.take(lp["edge_embedding1"], edge_attr_full[:, 0], axis=0)
                    + jnp.take(lp["edge_embedding2"], edge_attr_full[:, 1], axis=0))
        b = jnp.zeros((N_pad, D), jnp.float32).at[dst].add(edge_emb) * inv_deg[:, None]
        biases.append(jnp.zeros((N_pad, D_pad), jnp.float32).at[:, :D].set(b))
    B_stack = jnp.stack(biases, axis=0)

    out = fused_sage_layers(P.astype(jnp.bfloat16),
                            h0.astype(jnp.bfloat16),
                            B_stack.astype(jnp.bfloat16),
                            n_valid=N)
    # JK == 'last' -> node_representation = h_list[-1]
    return out[:N, :D]


# --------------------------------------------------------------------------
# Pure fp32 JAX reference (no Pallas) for a sanity check
# --------------------------------------------------------------------------
def reference_forward(params, x, edge_index, edge_attr):
    N = x.shape[0]
    num_layer = len(params["layers"])
    src, dst, edge_attr_full = _with_self_loops(edge_index, edge_attr, N)
    deg = jnp.zeros((N,), jnp.float32).at[dst].add(1.0)
    h = (jnp.take(params["x_embedding1"], x[:, 0], axis=0)
         + jnp.take(params["x_embedding2"], x[:, 1], axis=0)).astype(jnp.float32)
    for l, lp in enumerate(params["layers"]):
        edge_emb = (jnp.take(lp["edge_embedding1"], edge_attr_full[:, 0], axis=0)
                    + jnp.take(lp["edge_embedding2"], edge_attr_full[:, 1], axis=0))
        msg = h[src] + edge_emb
        agg = jnp.zeros_like(h).at[dst].add(msg) / deg[:, None]
        nrm = jnp.sqrt(jnp.sum(agg * agg, axis=-1, keepdims=True))
        y = agg / jnp.maximum(nrm, 1e-12)
        mean = jnp.mean(y, axis=0, keepdims=True)
        var = jnp.mean((y - mean) ** 2, axis=0, keepdims=True)
        y = (y - mean) / jnp.sqrt(var + 1e-5)
        if l != num_layer - 1:
            y = jnp.maximum(y, 0.0)
        h = y
    return h


# --------------------------------------------------------------------------
if __name__ == "__main__":
    num_layer = 2
    emb_dim = 128
    N = 32        # nodes
    E = 64        # edges

    key = jax.random.PRNGKey(0)
    k_param, k_x0, k_x1, k_src, k_dst, k_e0, k_e1 = jax.random.split(key, 7)

    params = init_params(k_param, num_layer, emb_dim)

    # node features: [N, 2] int  (atom type, chirality tag)
    x = jnp.stack([
        jax.random.randint(k_x0, (N,), 0, num_atom_type),
        jax.random.randint(k_x1, (N,), 0, num_chirality_tag),
    ], axis=1).astype(jnp.int32)

    # edge_index: [2, E] int, edge_attr: [E, 2] int (bond type, bond direction)
    edge_index = jnp.stack([
        jax.random.randint(k_src, (E,), 0, N),
        jax.random.randint(k_dst, (E,), 0, N),
    ], axis=0).astype(jnp.int32)
    edge_attr = jnp.stack([
        jax.random.randint(k_e0, (E,), 0, num_bond_type),
        jax.random.randint(k_e1, (E,), 0, num_bond_direction),
    ], axis=1).astype(jnp.int32)

    out = gnn_encoder_forward(params, x, edge_index, edge_attr)
    out = jax.block_until_ready(out)
    assert out.shape == (N, emb_dim), out.shape
    assert bool(jnp.all(jnp.isfinite(out)))

    # Loose tolerance: the kernel uses bf16 operands (fp32 accumulate) and BatchNorm
    # amplifies small column-wise deviations; the fp32 reference is exact.
    ref = reference_forward(params, x, edge_index, edge_attr)
    max_err = float(jnp.max(jnp.abs(out - ref)))
    assert max_err < 0.5, f"max abs err vs fp32 reference: {max_err}"

    print("KERNEL_OK")
</pallas_src>

<mosaic_0001>
module attributes {stable_mosaic.version = 11 : i64} {
  func.func @fused_sage_kernel(%arg0: i32, %arg1: memref<128x128xbf16, #tpu.memory_space<vmem>>, %arg2: memref<128x128xbf16, #tpu.memory_space<vmem>>, %arg3: memref<1x128x128xbf16, #tpu.memory_space<vmem>>, %arg4: memref<128x128xf32, #tpu.memory_space<vmem>>, %arg5: memref<128x128xbf16, #tpu.memory_space<vmem>>) attributes {dimension_semantics = [#tpu.dimension_semantics<arbitrary>], iteration_bounds = array<i64: 2>, scalar_prefetch = 0 : i64, scratch_operands = 1 : i64, tpu.core_type = #tpu.core_type<tc>, window_params = [{pipeline_mode = #tpu.pipeline_mode<synchronous>, transform_indices = @transform_0, window_bounds = array<i64: 128, 128>}, {pipeline_mode = #tpu.pipeline_mode<synchronous>, transform_indices = @transform_1, window_bounds = array<i64: 128, 128>}, {transform_indices = @transform_2, window_bounds = array<i64: 1, 128, 128>}, {pipeline_mode = #tpu.pipeline_mode<synchronous>, transform_indices = @transform_3, window_bounds = array<i64: 128, 128>}]} {
    %c0_i32 = arith.constant 0 : i32
    %0 = arith.cmpi eq, %arg0, %c0_i32 : i32
    %1 = arith.extui %0 : i1 to i32
    %c0_i32_0 = arith.constant 0 : i32
    %2 = arith.cmpi ne, %1, %c0_i32_0 : i32
    scf.if %2 {
      %c0_20 = arith.constant 0 : index
      %c0_21 = arith.constant 0 : index
      %56 = vector.load %arg2[%c0_20, %c0_21] : memref<128x128xbf16, #tpu.memory_space<vmem>>, vector<128x128xbf16>
      %c0_22 = arith.constant 0 : index
      %c0_23 = arith.constant 0 : index
      %57 = vector.load %arg5[%c0_22, %c0_23] : memref<128x128xbf16, #tpu.memory_space<vmem>>, vector<128x128xbf16>
      tpu.vector_store %arg5[%c0_22, %c0_23], %56 {strides = array<i32>} : memref<128x128xbf16, #tpu.memory_space<vmem>>, vector<128x128xbf16>,
    } else {
    }
    %c0 = arith.constant 0 : index
    %c0_1 = arith.constant 0 : index
    %3 = vector.load %arg1[%c0, %c0_1] : memref<128x128xbf16, #tpu.memory_space<vmem>>, vector<128x128xbf16>
    %c0_2 = arith.constant 0 : index
    %c0_3 = arith.constant 0 : index
    %4 = vector.load %arg5[%c0_2, %c0_3] : memref<128x128xbf16, #tpu.memory_space<vmem>>, vector<128x128xbf16>
    %cst = arith.constant dense<0.000000e+00> : vector<128x128xf32>
    %5 = tpu.matmul %3, %4, %cst {dimension_numbers = #tpu.dot_dimension_numbers<[1], [0], [0], [1], [0, 0, 1, 1], [], []>} : vector<128x128xbf16>, vector<128x128xbf16>, vector<128x128xf32> -> vector<128x128xf32>
    %c0_4 = arith.constant 0 : index
    %c0_5 = arith.constant 0 : index
    %c0_6 = arith.constant 0 : index
    %6 = vector.load %arg3[%c0_4, %c0_5, %c0_6] : memref<1x128x128xbf16, #tpu.memory_space<vmem>>, vector<1x128x128xbf16>
    %7 = vector.shape_cast %6 : vector<1x128x128xbf16> to vector<128x128xbf16>
    %8 = arith.extf %7 : vector<128x128xbf16> to vector<128x128xf32>
    %9 = arith.addf %5, %8 : vector<128x128xf32>
    %10 = arith.mulf %9, %9 : vector<128x128xf32>
    %cst_7 = arith.constant dense<0.000000e+00> : vector<128xf32>
    %11 = vector.multi_reduction <add>, %10, %cst_7 [1] : vector<128x128xf32> to vector<128xf32>
    %12 = vector.shape_cast %11 : vector<128xf32> to vector<128x1xf32>
    %cst_8 = arith.constant 1.000000e-24 : f32
    %13 = vector.broadcast %cst_8 : f32 to vector<128x1xf32>
    %14 = arith.maximumf %12, %13 : vector<128x1xf32>
    %15 = math.rsqrt %14 : vector<128x1xf32>
    %16 = vector.broadcast %15 : vector<128x1xf32> to vector<128x128xf32>
    %17 = arith.mulf %9, %16 : vector<128x128xf32>
    %18 = tpu.iota {dimensions = array<i32: 0>} : vector<128x128xi32>
    %c32_i32 = arith.constant 32 : i32
    %19 = vector.broadcast %c32_i32 : i32 to vector<128x128xi32>
    %20 = arith.cmpi slt, %18, %19 : vector<128x128xi32>
    %21 = arith.extui %20 : vector<128x128xi1> to vector<128x128xi32>
    %22 = arith.sitofp %21 : vector<128x128xi32> to vector<128x128xf32>
    %23 = arith.mulf %17, %22 : vector<128x128xf32>
    %cst_9 = arith.constant dense<0.000000e+00> : vector<128xf32>
    %24 = vector.multi_reduction <add>, %23, %cst_9 [0] : vector<128x128xf32> to vector<128xf32>
    %25 = vector.shape_cast %24 : vector<128xf32> to vector<1x128xf32>
    %cst_10 = arith.constant 3.125000e-02 : f32
    %26 = vector.broadcast %cst_10 : f32 to vector<1x128xf32>
    %27 = arith.mulf %25, %26 : vector<1x128xf32>
    %28 = vector.broadcast %27 : vector<1x128xf32> to vector<128x128xf32>
    %29 = arith.subf %23, %28 : vector<128x128xf32>
    %30 = arith.mulf %29, %22 : vector<128x128xf32>
    %31 = arith.mulf %30, %30 : vector<128x128xf32>
    %cst_11 = arith.constant dense<0.000000e+00> : vector<128xf32>
    %32 = vector.multi_reduction <add>, %31, %cst_11 [0] : vector<128x128xf32> to vector<128xf32>
    %33 = vector.shape_cast %32 : vector<128xf32> to vector<1x128xf32>
    %cst_12 = arith.constant 3.125000e-02 : f32
    %34 = vector.broadcast %cst_12 : f32 to vector<1x128xf32>
    %35 = arith.mulf %33, %34 : vector<1x128xf32>
    %36 = vector.broadcast %27 : vector<1x128xf32> to vector<128x128xf32>
    %37 = arith.subf %23, %36 : vector<128x128xf32>
    %cst_13 = arith.constant 9.99999974E-6 : f32
    %38 = vector.broadcast %cst_13 : f32 to vector<1x128xf32>
    %39 = arith.addf %35, %38 : vector<1x128xf32>
    %40 = math.rsqrt %39 : vector<1x128xf32>
    %41 = vector.broadcast %40 : vector<1x128xf32> to vector<128x128xf32>
    %42 = arith.mulf %37, %41 : vector<128x128xf32>
    %c1_i32 = arith.constant 1 : i32
    %43 = arith.cmpi slt, %arg0, %c1_i32 : i32
    %cst_14 = arith.constant 0.000000e+00 : f32
    %44 = vector.broadcast %cst_14 : f32 to vector<128x128xf32>
    %45 = arith.cmpf olt, %42, %44 : vector<128x128xf32>
    %46 = vector.broadcast %43 : i1 to vector<128x128xi1>
    %47 = arith.andi %46, %45 : vector<128x128xi1>
    %cst_15 = arith.constant 0.000000e+00 : f32
    %48 = vector.broadcast %cst_15 : f32 to vector<128x128xf32>
    %49 = arith.select %47, %48, %42 : vector<128x128xi1>, vector<128x128xf32>
    %50 = arith.mulf %49, %22 : vector<128x128xf32>
    %51 = arith.truncf %50 : vector<128x128xf32> to vector<128x128xbf16>
    %c0_16 = arith.constant 0 : index
    %c0_17 = arith.constant 0 : index
    %52 = vector.load %arg5[%c0_16, %c0_17] : memref<128x128xbf16, #tpu.memory_space<vmem>>, vector<128x128xbf16>
    tpu.vector_store %arg5[%c0_16, %c0_17], %51 {strides = array<i32>} : memref<128x128xbf16, #tpu.memory_space<vmem>>, vector<128x128xbf16>,
    %c1_i32_18 = arith.constant 1 : i32
    %53 = arith.cmpi eq, %arg0, %c1_i32_18 : i32
    %54 = arith.extui %53 : i1 to i32
    %c0_i32_19 = arith.constant 0 : i32
    %55 = arith.cmpi ne, %54, %c0_i32_19 : i32
    scf.if %55 {
      %c0_20 = arith.constant 0 : index
      %c0_21 = arith.constant 0 : index
      %56 = vector.load %arg4[%c0_20, %c0_21] : memref<128x128xf32, #tpu.memory_space<vmem>>, vector<128x128xf32>
      tpu.vector_store %arg4[%c0_20, %c0_21], %50 {strides = array<i32>} : memref<128x128xf32, #tpu.memory_space<vmem>>, vector<128x128xf32>,
    } else {
    }
    return
  }
  func.func @transform_0(%arg0: i32) -> (i32, i32) {
    %c0_i32 = arith.constant 0 : i32
    %c0_i32_0 = arith.constant 0 : i32
    %c0_i32_1 = arith.constant 0 : i32
    return %c0_i32, %c0_i32_0 : i32, i32
  }
  func.func @transform_1(%arg0: i32) -> (i32, i32) {
    %c0_i32 = arith.constant 0 : i32
    %c0_i32_0 = arith.constant 0 : i32
    %c0_i32_1 = arith.constant 0 : i32
    return %c0_i32, %c0_i32_0 : i32, i32
  }
  func.func @transform_2(%arg0: i32) -> (i32, i32, i32) {
    %c0_i32 = arith.constant 0 : i32
    %c0_i32_0 = arith.constant 0 : i32
    %c0_i32_1 = arith.constant 0 : i32
    return %arg0, %c0_i32, %c0_i32_0 : i32, i32, i32
  }
  func.func @transform_3(%arg0: i32) -> (i32, i32) {
    %c0_i32 = arith.constant 0 : i32
    %c0_i32_0 = arith.constant 0 : i32
    %c0_i32_1 = arith.constant 0 : i32
    return %c0_i32, %c0_i32_0 : i32, i32
  }
}

</mosaic_0001>

<llo_original>
// kernel: tpu_custom_call.1
$region0: #{tpu_custom_call.1}
  #allocation0 [shape = 'u32[]', space=smem, size = 0x4, offset = 0x4, fixed_abs, tag = 'smem constant byte address 0x4 - core index']
  #allocation1 [shape = 'u32[72,128]{1,0:T(1,128)}', space=vmem, size = 0x9000, scoped, tag = 'internal scratch']
  #allocation2 [shape = 'bf16[128,128]{1,0:T(8,128)(2,1)}', space=vmem, size = 0x8000, scoped, tag = 'scratch operand']
  %s0 = inlined_call_operand.hbm [shape: bf16[128,128], index: 0, kind: input, shape index: {}]
  %s1 = inlined_call_operand.hbm [shape: bf16[128,128], index: 1, kind: input, shape index: {}]
  %s2 = inlined_call_operand.hbm [shape: bf16[2,128,128], index: 2, kind: input, shape index: {}]
  %s3 = inlined_call_operand.hbm [shape: f32[128,128], index: 3, kind: output, shape index: {}]
  %s4 = sld [smem:[#allocation0]]
  $region65: #{tpu_custom_call.1} parent=0
    _
  %s6 = ssub.s32 1, %s4
  %s7 = scalar_select 0, %s6, %s4
  $region1: #{tpu_custom_call.1} parent=0
    #allocation3 [shape = 'u8[32768]{0}', space=vmem, size = 0x8000, scoped, tag = 'input window, operand 0, single buffered']
    #allocation4 [shape = 's32[2]{0}', space=sflag, size = 0x8, scoped, tag = 'scoped memory for tpu_custom_call.1']
    #allocation5 [shape = 's32[2]{0}', space=sflag, size = 0x8, scoped, tag = 'scoped memory for tpu_custom_call.1']
    #allocation6 [shape = 'u8[32768]{0}', space=vmem, size = 0x8000, scoped, tag = 'input window, operand 1, single buffered']
    #allocation7 [shape = 's32[1]{0}', space=sflag, size = 0x4, scoped, tag = 'scoped memory for tpu_custom_call.1']
    #allocation8 [shape = 'u8[65536]{0}', space=vmem, size = 0x10000, scoped, tag = 'input window, operand 2']
    #allocation9 [shape = 'u8[65536]{0}', space=vmem, size = 0x10000, scoped, tag = 'output window, operand 0, single buffered']
    %8 = vsyncpa [#allocation4], 0
    %9 = vsyncpa [#allocation7], 0
    %10 = vsyncpa [#allocation5], 0
    loop: start=0, step=1, limit=4
    $region2: #{tpu_custom_call.1} parent=1 // loop_pre_header
      _
    $region3: #{tpu_custom_call.1} parent=1 // loop_header
      %s12 = sphi 0, %s16
      %p13 = scmp.ge.s32.totalorder %s12, 4
      %s20 = sphi 0, %s20
      %s22 = sphi 0, %s20
      %s23 = sphi 0, %s22
      %s37 = sphi 0, %s23
      %s41 = sphi 0, %s41
      %s43 = sphi 0, %s41
      %s44 = sphi 0, %s43
      %s58 = sphi 0, %s44
      %s64 = sphi 0, %s66
      %s67 = sphi 0, %s64
      %s68 = sphi 0, %s67
      %s84 = sphi 0, %s68
      %s88 = sphi 0, %s88
      %s90 = sphi 0, %s88
      %s91 = sphi 0, %s90
      %s105 = sphi 0, %s91
    $region4: #{tpu_custom_call.1} parent=1 // loop_header_branch
      %15 = sbr.rel (%p13) target = $region8
    $region5: #{tpu_custom_call.1} parent=1 // loop_body
      %s17 = ssub.s32 %s12, 1
      %s18 = ssub.s32 %s12, 2
      %s19 = sadd.s32 %s12, 1
      %s21 = sadd.s32 %s20, 1
      %p24 = scmp.eq.s32.totalorder %s12, 1
      %p25 = scmp.ne.s32.totalorder %s20, %s22
      %p26 = scmp.eq.s32.totalorder %s12, 0
      %p27 = por %p25, %p26
      %p28 = scmp.ne.s32.totalorder %s20, %s22
      %p29 = scmp.eq.s32.totalorder %s17, 1
      %p30 = por %p28, %p29
      %p31 = scmp.ne.s32.totalorder %s22, %s23
      %p32 = scmp.eq.s32.totalorder %s17, 0
      %p33 = por %p31, %p32
      %p34 = scmp.ne.s32.totalorder %s22, %s23
      %p35 = scmp.eq.s32.totalorder %s18, 1
      %p36 = por %p34, %p35
      %p38 = scmp.ne.s32.totalorder %s23, %s37
      %p39 = scmp.eq.s32.totalorder %s18, 0
      %p40 = por %p38, %p39
      %s42 = sadd.s32 %s41, 1
      %p45 = scmp.eq.s32.totalorder %s12, 1
      %p46 = scmp.ne.s32.totalorder %s41, %s43
      %p47 = scmp.eq.s32.totalorder %s12, 0
      %p48 = por %p46, %p47
      %p49 = scmp.ne.s32.totalorder %s41, %s43
      %p50 = scmp.eq.s32.totalorder %s17, 1
      %p51 = por %p49, %p50
      %p52 = scmp.ne.s32.totalorder %s43, %s44
      %p53 = scmp.eq.s32.totalorder %s17, 0
      %p54 = por %p52, %p53
      %p55 = scmp.ne.s32.totalorder %s43, %s44
      %p56 = scmp.eq.s32.totalorder %s18, 1
      %p57 = por %p55, %p56
      %p59 = scmp.ne.s32.totalorder %s44, %s58
      %p60 = scmp.eq.s32.totalorder %s18, 0
      %p61 = por %p59, %p60
      %s62 = ssub.s32 %s12, %s19
      %p63 = scmp.eq.s32.totalorder %s62, 0
      %s65 = sadd.s32 %s64, 1
      %s66 = scalar_select %p63, %s64, %s65
      %p69 = pneg %p63
      %p70 = scmp.eq.s32.totalorder %s12, 1
      %p71 = por %p69, %p70
      %p72 = scmp.ne.s32.totalorder %s64, %s67
      %p73 = scmp.eq.s32.totalorder %s12, 0
      %p74 = por %p72, %p73
      %p75 = scmp.ne.s32.totalorder %s64, %s67
      %p76 = scmp.eq.s32.totalorder %s17, 1
      %p77 = por %p75, %p76
      %p78 = scmp.ne.s32.totalorder %s67, %s68
      %p79 = scmp.eq.s32.totalorder %s17, 0
      %p80 = por %p78, %p79
      %p81 = scmp.ne.s32.totalorder %s67, %s68
      %p82 = scmp.eq.s32.totalorder %s18, 1
      %p83 = por %p81, %p82
      %p85 = scmp.ne.s32.totalorder %s68, %s84
      %p86 = scmp.eq.s32.totalorder %s18, 0
      %p87 = por %p85, %p86
      %s89 = sadd.s32 %s88, 1
      %p92 = scmp.eq.s32.totalorder %s12, 1
      %p93 = scmp.ne.s32.totalorder %s88, %s90
      %p94 = scmp.eq.s32.totalorder %s12, 0
      %p95 = por %p93, %p94
      %p96 = scmp.ne.s32.totalorder %s88, %s90
      %p97 = scmp.eq.s32.totalorder %s17, 1
      %p98 = por %p96, %p97
      %p99 = scmp.ne.s32.totalorder %s90, %s91
      %p100 = scmp.eq.s32.totalorder %s17, 0
      %p101 = por %p99, %p100
      %p102 = scmp.ne.s32.totalorder %s90, %s91
      %p103 = scmp.eq.s32.totalorder %s18, 1
      %p104 = por %p102, %p103
      %p106 = scmp.ne.s32.totalorder %s91, %s105
      %p107 = scmp.eq.s32.totalorder %s18, 0
      %p108 = por %p106, %p107
      %p109 = scmp.le.s32.totalorder 1, %s12
      %p110 = scmp.lt.s32.totalorder %s12, 3
      %p111 = pnand %p109, %p110
      %p112 = pneg %p111
      // Predicated region
      $region9: #{tpu_custom_call.1} parent=5 // pred_check
        _
      $region10: #{tpu_custom_call.1} parent=5 // pred_check_branch
        %114 = sbr.rel (%p111) target = $region12
      $region11: #{tpu_custom_call.1} parent=5 // pred_region
        %s115 = ssub.s32 %s12, 1
        // Predicated region
        $region13: #{tpu_custom_call.1} parent=11 // pred_check
          %p116 = pneg %p33
        $region14: #{tpu_custom_call.1} parent=11 // pred_check_branch
          %118 = sbr.rel (%p116) target = $region16
        $region15: #{tpu_custom_call.1} parent=11 // pred_region
          %120 = vsyncadd [#allocation4], 0
          %s121 = sshll.u32 %s0, 4
          %s122 = int_to_ptr.hbm [resolvable:$true] %s121
          %s123 = sshll.u32 [#allocation3], 4
          %s124 = int_to_ptr.vmem [resolvable:$true] %s123
          %129 = dma.hbm_to_vmem [thread:$0]  %s122, 1024, %s124, [#allocation4], 64, 64, 4
        $region16: #{tpu_custom_call.1} parent=11 // pred_fallthru
          _
        // Predicated region
        $region17: #{tpu_custom_call.1} parent=11 // pred_check
          %p130 = pneg %p54
        $region18: #{tpu_custom_call.1} parent=11 // pred_check_branch
          %132 = sbr.rel (%p130) target = $region20
        $region19: #{tpu_custom_call.1} parent=11 // pred_region
          %134 = vsyncadd [#allocation7], 0
          %s135 = sshll.u32 %s1, 4
          %s136 = int_to_ptr.hbm [resolvable:$true] %s135
          %s137 = sshll.u32 [#allocation6], 4
          %s138 = int_to_ptr.vmem [resolvable:$true] %s137
          %143 = dma.hbm_to_vmem [thread:$0]  %s136, 1024, %s138, [#allocation7], 64, 64, 4
        $region20: #{tpu_custom_call.1} parent=11 // pred_fallthru
          _
      $region12: #{tpu_custom_call.1} parent=5 // pred_fallthru
        _
      %p144 = scmp.lt.s32.totalorder %s12, 2
      // Predicated region
      $region21: #{tpu_custom_call.1} parent=5 // pred_check
        %p145 = pneg %p144
      $region22: #{tpu_custom_call.1} parent=5 // pred_check_branch
        %147 = sbr.rel (%p145) target = $region24
      $region23: #{tpu_custom_call.1} parent=5 // pred_region
        // Predicated region
        $region25: #{tpu_custom_call.1} parent=23 // pred_check
          %p148 = pneg %p74
        $region26: #{tpu_custom_call.1} parent=23 // pred_check_branch
          %150 = sbr.rel (%p148) target = $region28
        $region27: #{tpu_custom_call.1} parent=23 // pred_region
          %s151 = sand.u32 %s12, 1
          %s152 = scalar_lea.sflag [#allocation4], %s151
          %s153 = sand.u32 %s64, 1
          %s154 = smul.addr %s153, 64
          %s155 = scalar_lea.vmem [#allocation8], %s154
          %157 = vsyncadd %s152, 0
          %s158 = smul.addr %s12, 16
          %s159 = smul.addr %s158, 4
          %s160 = scalar_lea.hbm %s2, %s159
          %s161 = sshll.u32 %s160, 4
          %s162 = int_to_ptr.hbm [resolvable:$true] %s161
          %s163 = sshll.u32 %s155, 4
          %s164 = int_to_ptr.vmem [resolvable:$true] %s163
          %169 = dma.hbm_to_vmem [thread:$0]  %s162, 1024, %s164, %s152, 64, 64, 4
        $region28: #{tpu_custom_call.1} parent=23 // pred_fallthru
          _
      $region24: #{tpu_custom_call.1} parent=5 // pred_fallthru
        _
      %p170 = scmp.le.s32.totalorder 1, %s12
      %p171 = scmp.lt.s32.totalorder %s12, 3
      %p172 = pnand %p170, %p171
      %p173 = pneg %p172
      // Predicated region
      $region29: #{tpu_custom_call.1} parent=5 // pred_check
        _
      $region30: #{tpu_custom_call.1} parent=5 // pred_check_branch
        %175 = sbr.rel (%p172) target = $region32
      $region31: #{tpu_custom_call.1} parent=5 // pred_region
        %s176 = ssub.s32 %s12, 1
        // Predicated region
        $region33: #{tpu_custom_call.1} parent=31 // pred_check
          %p177 = pneg %p33
        $region34: #{tpu_custom_call.1} parent=31 // pred_check_branch
          %179 = sbr.rel (%p177) target = $region36
        $region35: #{tpu_custom_call.1} parent=31 // pred_region
          %181 = dma.done [#allocation4], 1024
        $region36: #{tpu_custom_call.1} parent=31 // pred_fallthru
          _
        // Predicated region
        $region37: #{tpu_custom_call.1} parent=31 // pred_check
          %p182 = pneg %p54
        $region38: #{tpu_custom_call.1} parent=31 // pred_check_branch
          %184 = sbr.rel (%p182) target = $region40
        $region39: #{tpu_custom_call.1} parent=31 // pred_region
          %186 = dma.done [#allocation7], 1024
        $region40: #{tpu_custom_call.1} parent=31 // pred_fallthru
          _
        %s187 = sand.u32 %s17, 1
        %s188 = scalar_lea.sflag [#allocation4], %s187
        %s189 = sand.u32 %s67, 1
        %s190 = smul.addr %s189, 64
        %s191 = scalar_lea.vmem [#allocation8], %s190
        // Predicated region
        $region41: #{tpu_custom_call.1} parent=31 // pred_check
          %p192 = pneg %p80
        $region42: #{tpu_custom_call.1} parent=31 // pred_check_branch
          %194 = sbr.rel (%p192) target = $region44
        $region43: #{tpu_custom_call.1} parent=31 // pred_region
          %196 = dma.done %s188, 1024
        $region44: #{tpu_custom_call.1} parent=31 // pred_fallthru
          _
        %p197 = pneg %p33
        %p198 = pneg %p30
        %p199 = pneg %p54
        %p200 = pneg %p51
        %s201 = sand.u32 %s17, 1
        %s202 = scalar_lea.sflag [#allocation4], %s201
        %s203 = sand.u32 %s67, 1
        %s204 = smul.addr %s203, 64
        %s205 = scalar_lea.vmem [#allocation8], %s204
        %p206 = pneg %p80
        %p207 = pneg %p77
        %p208 = pneg %p101
        %p209 = pneg %p98
        %p210 = scmp.eq.s32.totalorder %s17, 0
        // Predicated region
        $region45: #{tpu_custom_call.1} parent=31 // pred_check
          %p211 = pneg %p210
        $region46: #{tpu_custom_call.1} parent=31 // pred_check_branch
          %213 = sbr.rel (%p211) target = $region48
        $region47: #{tpu_custom_call.1} parent=31 // pred_region
          %v214 = vld [vmem:[#allocation6] sm:$0xf]
          %v215 = vld [vmem:[#allocation6 + $0x4] sm:$0xf]
          %v216 = vld [vmem:[#allocation6 + $0x8] sm:$0xf]
          %v217 = vld [vmem:[#allocation6 + $0xc] sm:$0xf]
          %v218 = vld [vmem:[#allocation6 + $0x10] sm:$0xf]
          %v219 = vld [vmem:[#allocation6 + $0x14] sm:$0xf]
          %v220 = vld [vmem:[#allocation6 + $0x18] sm:$0xf]
          %v221 = vld [vmem:[#allocation6 + $0x1c] sm:$0xf]
          %v222 = vld [vmem:[#allocation6 + $0x20] sm:$0xf]
          %v223 = vld [vmem:[#allocation6 + $0x24] sm:$0xf]
          %v224 = vld [vmem:[#allocation6 + $0x28] sm:$0xf]
          %v225 = vld [vmem:[#allocation6 + $0x2c] sm:$0xf]
          %v226 = vld [vmem:[#allocation6 + $0x30] sm:$0xf]
          %v227 = vld [vmem:[#allocation6 + $0x34] sm:$0xf]
          %v228 = vld [vmem:[#allocation6 + $0x38] sm:$0xf]
          %v229 = vld [vmem:[#allocation6 + $0x3c] sm:$0xf]
          %230 = vst [vmem:[#allocation2] sm:$0xf] %v214
          %231 = vst [vmem:[#allocation2 + $0x4] sm:$0xf] %v215
          %232 = vst [vmem:[#allocation2 + $0x8] sm:$0xf] %v216
          %233 = vst [vmem:[#allocation2 + $0xc] sm:$0xf] %v217
          %234 = vst [vmem:[#allocation2 + $0x10] sm:$0xf] %v218
          %235 = vst [vmem:[#allocation2 + $0x14] sm:$0xf] %v219
          %236 = vst [vmem:[#allocation2 + $0x18] sm:$0xf] %v220
          %237 = vst [vmem:[#allocation2 + $0x1c] sm:$0xf] %v221
          %238 = vst [vmem:[#allocation2 + $0x20] sm:$0xf] %v222
          %239 = vst [vmem:[#allocation2 + $0x24] sm:$0xf] %v223
          %240 = vst [vmem:[#allocation2 + $0x28] sm:$0xf] %v224
          %241 = vst [vmem:[#allocation2 + $0x2c] sm:$0xf] %v225
          %242 = vst [vmem:[#allocation2 + $0x30] sm:$0xf] %v226
          %243 = vst [vmem:[#allocation2 + $0x34] sm:$0xf] %v227
          %244 = vst [vmem:[#allocation2 + $0x38] sm:$0xf] %v228
          %245 = vst [vmem:[#allocation2 + $0x3c] sm:$0xf] %v229
        $region48: #{tpu_custom_call.1} parent=31 // pred_fallthru
          _
        %v246 = vld [vmem:[#allocation3] sm:$0xf]
        %v247 = vld [vmem:[#allocation3 + $0x4] sm:$0xf]
        %v248 = vld [vmem:[#allocation3 + $0x8] sm:$0xf]
        %v249 = vld [vmem:[#allocation3 + $0xc] sm:$0xf]
        %v250 = vld [vmem:[#allocation3 + $0x10] sm:$0xf]
        %v251 = vld [vmem:[#allocation3 + $0x14] sm:$0xf]
        %v252 = vld [vmem:[#allocation3 + $0x18] sm:$0xf]
        %v253 = vld [vmem:[#allocation3 + $0x1c] sm:$0xf]
        %v254 = vld [vmem:[#allocation3 + $0x20] sm:$0xf]
        %v255 = vld [vmem:[#allocation3 + $0x24] sm:$0xf]
        %v256 = vld [vmem:[#allocation3 + $0x28] sm:$0xf]
        %v257 = vld [vmem:[#allocation3 + $0x2c] sm:$0xf]
        %v258 = vld [vmem:[#allocation3 + $0x30] sm:$0xf]
        %v259 = vld [vmem:[#allocation3 + $0x34] sm:$0xf]
        %v260 = vld [vmem:[#allocation3 + $0x38] sm:$0xf]
        %v261 = vld [vmem:[#allocation3 + $0x3c] sm:$0xf]
        %v262 = vld [vmem:[#allocation2] sm:$0xf]
        %v263 = vld [vmem:[#allocation2 + $0x4] sm:$0xf]
        %v264 = vld [vmem:[#allocation2 + $0x8] sm:$0xf]
        %v265 = vld [vmem:[#allocation2 + $0xc] sm:$0xf]
        %v266 = vld [vmem:[#allocation2 + $0x10] sm:$0xf]
        %v267 = vld [vmem:[#allocation2 + $0x14] sm:$0xf]
        %v268 = vld [vmem:[#allocation2 + $0x18] sm:$0xf]
        %v269 = vld [vmem:[#allocation2 + $0x1c] sm:$0xf]
        %v270 = vld [vmem:[#allocation2 + $0x20] sm:$0xf]
        %v271 = vld [vmem:[#allocation2 + $0x24] sm:$0xf]
        %v272 = vld [vmem:[#allocation2 + $0x28] sm:$0xf]
        %v273 = vld [vmem:[#allocation2 + $0x2c] sm:$0xf]
        %v274 = vld [vmem:[#allocation2 + $0x30] sm:$0xf]
        %v275 = vld [vmem:[#allocation2 + $0x34] sm:$0xf]
        %v276 = vld [vmem:[#allocation2 + $0x38] sm:$0xf]
        %v277 = vld [vmem:[#allocation2 + $0x3c] sm:$0xf]
        %v278 = vld [vmem:[%s191] sm:$0xf]
        %v279 = vld [vmem:[%s191 + $0x4] sm:$0xf]
        %v280 = vld [vmem:[%s191 + $0x8] sm:$0xf]
        %v281 = vld [vmem:[%s191 + $0xc] sm:$0xf]
        %v282 = vld [vmem:[%s191 + $0x10] sm:$0xf]
        %v283 = vld [vmem:[%s191 + $0x14] sm:$0xf]
        %v284 = vld [vmem:[%s191 + $0x18] sm:$0xf]
        %v285 = vld [vmem:[%s191 + $0x1c] sm:$0xf]
        %v286 = vld [vmem:[%s191 + $0x20] sm:$0xf]
        %v287 = vld [vmem:[%s191 + $0x24] sm:$0xf]
        %v288 = vld [vmem:[%s191 + $0x28] sm:$0xf]
        %v289 = vld [vmem:[%s191 + $0x2c] sm:$0xf]
        %v290 = vld [vmem:[%s191 + $0x30] sm:$0xf]
        %v291 = vld [vmem:[%s191 + $0x34] sm:$0xf]
        %v292 = vld [vmem:[%s191 + $0x38] sm:$0xf]
        %v293 = vld [vmem:[%s191 + $0x3c] sm:$0xf]
        %v294 = vunpack.c.l.bf16 %v278
        %v295 = vunpack.c.l.bf16 %v279
        %v296 = vunpack.c.l.bf16 %v280
        %v297 = vunpack.c.l.bf16 %v281
        %v298 = vunpack.c.l.bf16 %v282
        %v299 = vunpack.c.l.bf16 %v283
        %v300 = vunpack.c.l.bf16 %v284
        %v301 = vunpack.c.l.bf16 %v285
        %v302 = vunpack.c.l.bf16 %v286
        %v303 = vunpack.c.l.bf16 %v287
        %v304 = vunpack.c.l.bf16 %v288
        %v305 = vunpack.c.l.bf16 %v289
        %v306 = vunpack.c.l.bf16 %v290
        %v307 = vunpack.c.l.bf16 %v291
        %v308 = vunpack.c.l.bf16 %v292
        %v309 = vunpack.c.l.bf16 %v293
        %v326 = vunpack.c.l.b16 %v246
        %v327 = vunpack.c.l.b16 %v247
        %v328 = vunpack.c.l.b16 %v248
        %v329 = vunpack.c.l.b16 %v249
        %v330 = vunpack.c.l.b16 %v250
        %v331 = vunpack.c.l.b16 %v251
        %v332 = vunpack.c.l.b16 %v252
        %v333 = vunpack.c.l.b16 %v253
        %v334 = vunpack.c.l.b16 %v254
        %v335 = vunpack.c.l.b16 %v255
        %v336 = vunpack.c.l.b16 %v256
        %v337 = vunpack.c.l.b16 %v257
        %v338 = vunpack.c.l.b16 %v258
        %v339 = vunpack.c.l.b16 %v259
        %v340 = vunpack.c.l.b16 %v260
        %v341 = vunpack.c.l.b16 %v261
        %v342 = vpack.c.b16 %v327, %v326
        %v343 = vpack.c.b16 %v329, %v328
        %v344 = vpack.c.b16 %v331, %v330
        %v345 = vpack.c.b16 %v333, %v332
        %v346 = vpack.c.b16 %v335, %v334
        %v347 = vpack.c.b16 %v337, %v336
        %v348 = vpack.c.b16 %v339, %v338
        %v349 = vpack.c.b16 %v341, %v340
        %v374 = vunpack.c.l.b16 %v262
        %v375 = vunpack.c.l.b16 %v263
        %v376 = vunpack.c.l.b16 %v264
        %v377 = vunpack.c.l.b16 %v265
        %v378 = vunpack.c.l.b16 %v266
        %v379 = vunpack.c.l.b16 %v267
        %v380 = vunpack.c.l.b16 %v268
        %v381 = vunpack.c.l.b16 %v269
        %v382 = vunpack.c.l.b16 %v270
        %v383 = vunpack.c.l.b16 %v271
        %v384 = vunpack.c.l.b16 %v272
        %v385 = vunpack.c.l.b16 %v273
        %v386 = vunpack.c.l.b16 %v274
        %v387 = vunpack.c.l.b16 %v275
        %v388 = vunpack.c.l.b16 %v276
        %v389 = vunpack.c.l.b16 %v277
        %v390 = vpack.c.b16 %v375, %v374
        %v391 = vpack.c.b16 %v377, %v376
        %v392 = vpack.c.b16 %v379, %v378
        %v393 = vpack.c.b16 %v381, %v380
        %v394 = vpack.c.b16 %v383, %v382
        %v395 = vpack.c.b16 %v385, %v384
        %v396 = vpack.c.b16 %v387, %v386
        %v397 = vpack.c.b16 %v389, %v388
        %406 = vmatpush.bf16.msra.mxu0 %v397
        %407 = vmatpush.bf16.msra.mxu0 %v396
        %408 = vmatpush.bf16.msra.mxu0 %v395
        %409 = vmatpush.bf16.msra.mxu0 %v394
        %410 = vmatpush.bf16.msra.mxu0 %v393
        %411 = vmatpush.bf16.msra.mxu0 %v392
        %412 = vmatpush.bf16.msra.mxu0 %v391
        %413 = vmatpush.bf16.msra.mxu0 %v390
        %414 = vmatmul.bf16.gmra.mxu0 %v342
        %v415 = vpop.f32.mrf.mxu0
        %v416 = vadd.f32 %v294, %v415
        %v417 = vpop.f32.mrf.mxu0
        %v418 = vadd.f32 %v295, %v417
        %419 = vmatmul.bf16.gmra.mxu0 %v343
        %v420 = vpop.f32.mrf.mxu0
        %v421 = vadd.f32 %v296, %v420
        %v422 = vpop.f32.mrf.mxu0
        %v423 = vadd.f32 %v297, %v422
        %424 = vmatmul.bf16.gmra.mxu0 %v344
        %v425 = vpop.f32.mrf.mxu0
        %v426 = vadd.f32 %v298, %v425
        %v427 = vpop.f32.mrf.mxu0
        %v428 = vadd.f32 %v299, %v427
        %429 = vmatmul.bf16.gmra.mxu0 %v345
        %v430 = vpop.f32.mrf.mxu0
        %v431 = vadd.f32 %v300, %v430
        %v432 = vpop.f32.mrf.mxu0
        %v433 = vadd.f32 %v301, %v432
        %434 = vmatmul.bf16.gmra.mxu0 %v346
        %v435 = vpop.f32.mrf.mxu0
        %v436 = vadd.f32 %v302, %v435
        %v437 = vpop.f32.mrf.mxu0
        %v438 = vadd.f32 %v303, %v437
        %439 = vmatmul.bf16.gmra.mxu0 %v347
        %v440 = vpop.f32.mrf.mxu0
        %v441 = vadd.f32 %v304, %v440
        %v442 = vpop.f32.mrf.mxu0
        %v443 = vadd.f32 %v305, %v442
        %444 = vmatmul.bf16.gmra.mxu0 %v348
        %v445 = vpop.f32.mrf.mxu0
        %v446 = vadd.f32 %v306, %v445
        %v447 = vpop.f32.mrf.mxu0
        %v448 = vadd.f32 %v307, %v447
        %449 = vmatmul.bf16.gmra.mxu0 %v349
        %v450 = vpop.f32.mrf.mxu0
        %v451 = vadd.f32 %v308, %v450
        %v452 = vpop.f32.mrf.mxu0
        %v453 = vadd.f32 %v309, %v452
        %454 = vdwg.mxu0
        %v455 = vmul.f32 %v416, %v416
        %v456 = vmul.f32 %v418, %v418
        %v457 = vmul.f32 %v421, %v421
        %v458 = vmul.f32 %v423, %v423
        %v459 = vmul.f32 %v426, %v426
        %v460 = vmul.f32 %v428, %v428
        %v461 = vmul.f32 %v431, %v431
        %v462 = vmul.f32 %v433, %v433
        %v463 = vmul.f32 %v436, %v436
        %v464 = vmul.f32 %v438, %v438
        %v465 = vmul.f32 %v441, %v441
        %v466 = vmul.f32 %v443, %v443
        %v467 = vmul.f32 %v446, %v446
        %v468 = vmul.f32 %v448, %v448
        %v469 = vmul.f32 %v451, %v451
        %v470 = vmul.f32 %v453, %v453
        %471 = vadd.xlane.f32.xlu0 %v455
        %v472 = vpop.xlane.xlu0 %471
        %473 = vadd.xlane.f32.xlu0 %v456
        %v474 = vpop.xlane.xlu0 %473
        %475 = vadd.xlane.f32.xlu0 %v457
        %v476 = vpop.xlane.xlu0 %475
        %477 = vadd.xlane.f32.xlu0 %v458
        %v478 = vpop.xlane.xlu0 %477
        %479 = vadd.xlane.f32.xlu0 %v459
        %v480 = vpop.xlane.xlu0 %479
        %481 = vadd.xlane.f32.xlu0 %v460
        %v482 = vpop.xlane.xlu0 %481
        %483 = vadd.xlane.f32.xlu0 %v461
        %v484 = vpop.xlane.xlu0 %483
        %485 = vadd.xlane.f32.xlu0 %v462
        %v486 = vpop.xlane.xlu0 %485
        %487 = vadd.xlane.f32.xlu0 %v463
        %v488 = vpop.xlane.xlu0 %487
        %489 = vadd.xlane.f32.xlu0 %v464
        %v490 = vpop.xlane.xlu0 %489
        %491 = vadd.xlane.f32.xlu0 %v465
        %v492 = vpop.xlane.xlu0 %491
        %493 = vadd.xlane.f32.xlu0 %v466
        %v494 = vpop.xlane.xlu0 %493
        %495 = vadd.xlane.f32.xlu0 %v467
        %v496 = vpop.xlane.xlu0 %495
        %497 = vadd.xlane.f32.xlu0 %v468
        %v498 = vpop.xlane.xlu0 %497
        %499 = vadd.xlane.f32.xlu0 %v469
        %v500 = vpop.xlane.xlu0 %499
        %501 = vadd.xlane.f32.xlu0 %v470
        %v502 = vpop.xlane.xlu0 %501
        %v503 = vmax.f32 %v472, 1e-24
        %v504 = vmax.f32 %v474, 1e-24
        %v505 = vmax.f32 %v476, 1e-24
        %v506 = vmax.f32 %v478, 1e-24
        %v507 = vmax.f32 %v480, 1e-24
        %v508 = vmax.f32 %v482, 1e-24
        %v509 = vmax.f32 %v484, 1e-24
        %v510 = vmax.f32 %v486, 1e-24
        %v511 = vmax.f32 %v488, 1e-24
        %v512 = vmax.f32 %v490, 1e-24
        %v513 = vmax.f32 %v492, 1e-24
        %v514 = vmax.f32 %v494, 1e-24
        %v515 = vmax.f32 %v496, 1e-24
        %v516 = vmax.f32 %v498, 1e-24
        %v517 = vmax.f32 %v500, 1e-24
        %v518 = vmax.f32 %v502, 1e-24
        %v519 = vrsqrt.pop %v503
        %v520 = vmul.f32 %v519, %v503
        %v521 = vmul.f32 %v520, %v519
        %v522 = vmul.f32 0.5, %v521
        %v523 = vsub.f32 1.5, %v522
        %v524 = vmul.f32 %v519, %v523
        %vm525 = vweird.f32 %v503
        %vm526 = vweird.f32 %v519
        %vm527 = vmor %vm525, %vm526
        %v528 = vsel %vm527, %v519, %v524
        %v529 = vrsqrt.pop %v504
        %v530 = vmul.f32 %v529, %v504
        %v531 = vmul.f32 %v530, %v529
        %v532 = vmul.f32 0.5, %v531
        %v533 = vsub.f32 1.5, %v532
        %v534 = vmul.f32 %v529, %v533
        %vm535 = vweird.f32 %v504
        %vm536 = vweird.f32 %v529
        %vm537 = vmor %vm535, %vm536
        %v538 = vsel %vm537, %v529, %v534
        %v539 = vrsqrt.pop %v505
        %v540 = vmul.f32 %v539, %v505
        %v541 = vmul.f32 %v540, %v539
        %v542 = vmul.f32 0.5, %v541
        %v543 = vsub.f32 1.5, %v542
        %v544 = vmul.f32 %v539, %v543
        %vm545 = vweird.f32 %v505
        %vm546 = vweird.f32 %v539
        %vm547 = vmor %vm545, %vm546
        %v548 = vsel %vm547, %v539, %v544
        %v549 = vrsqrt.pop %v506
        %v550 = vmul.f32 %v549, %v506
        %v551 = vmul.f32 %v550, %v549
        %v552 = vmul.f32 0.5, %v551
        %v553 = vsub.f32 1.5, %v552
        %v554 = vmul.f32 %v549, %v553
        %vm555 = vweird.f32 %v506
        %vm556 = vweird.f32 %v549
        %vm557 = vmor %vm555, %vm556
        %v558 = vsel %vm557, %v549, %v554
        %v559 = vrsqrt.pop %v507
        %v560 = vmul.f32 %v559, %v507
        %v561 = vmul.f32 %v560, %v559
        %v562 = vmul.f32 0.5, %v561
        %v563 = vsub.f32 1.5, %v562
        %v564 = vmul.f32 %v559, %v563
        %vm565 = vweird.f32 %v507
        %vm566 = vweird.f32 %v559
        %vm567 = vmor %vm565, %vm566
        %v568 = vsel %vm567, %v559, %v564
        %v569 = vrsqrt.pop %v508
        %v570 = vmul.f32 %v569, %v508
        %v571 = vmul.f32 %v570, %v569
        %v572 = vmul.f32 0.5, %v571
        %v573 = vsub.f32 1.5, %v572
        %v574 = vmul.f32 %v569, %v573
        %vm575 = vweird.f32 %v508
        %vm576 = vweird.f32 %v569
        %vm577 = vmor %vm575, %vm576
        %v578 = vsel %vm577, %v569, %v574
        %v579 = vrsqrt.pop %v509
        %v580 = vmul.f32 %v579, %v509
        %v581 = vmul.f32 %v580, %v579
        %v582 = vmul.f32 0.5, %v581
        %v583 = vsub.f32 1.5, %v582
        %v584 = vmul.f32 %v579, %v583
        %vm585 = vweird.f32 %v509
        %vm586 = vweird.f32 %v579
        %vm587 = vmor %vm585, %vm586
        %v588 = vsel %vm587, %v579, %v584
        %v589 = vrsqrt.pop %v510
        %v590 = vmul.f32 %v589, %v510
        %v591 = vmul.f32 %v590, %v589
        %v592 = vmul.f32 0.5, %v591
        %v593 = vsub.f32 1.5, %v592
        %v594 = vmul.f32 %v589, %v593
        %vm595 = vweird.f32 %v510
        %vm596 = vweird.f32 %v589
        %vm597 = vmor %vm595, %vm596
        %v598 = vsel %vm597, %v589, %v594
        %v599 = vrsqrt.pop %v511
        %v600 = vmul.f32 %v599, %v511
        %v601 = vmul.f32 %v600, %v599
        %v602 = vmul.f32 0.5, %v601
        %v603 = vsub.f32 1.5, %v602
        %v604 = vmul.f32 %v599, %v603
        %vm605 = vweird.f32 %v511
        %vm606 = vweird.f32 %v599
        %vm607 = vmor %vm605, %vm606
        %v608 = vsel %vm607, %v599, %v604
        %v609 = vrsqrt.pop %v512
        %v610 = vmul.f32 %v609, %v512
        %v611 = vmul.f32 %v610, %v609
        %v612 = vmul.f32 0.5, %v611
        %v613 = vsub.f32 1.5, %v612
        %v614 = vmul.f32 %v609, %v613
        %vm615 = vweird.f32 %v512
        %vm616 = vweird.f32 %v609
        %vm617 = vmor %vm615, %vm616
        %v618 = vsel %vm617, %v609, %v614
        %v619 = vrsqrt.pop %v513
        %v620 = vmul.f32 %v619, %v513
        %v621 = vmul.f32 %v620, %v619
        %v622 = vmul.f32 0.5, %v621
        %v623 = vsub.f32 1.5, %v622
        %v624 = vmul.f32 %v619, %v623
        %vm625 = vweird.f32 %v513
        %vm626 = vweird.f32 %v619
        %vm627 = vmor %vm625, %vm626
        %v628 = vsel %vm627, %v619, %v624
        %v629 = vrsqrt.pop %v514
        %v630 = vmul.f32 %v629, %v514
        %v631 = vmul.f32 %v630, %v629
        %v632 = vmul.f32 0.5, %v631
        %v633 = vsub.f32 1.5, %v632
        %v634 = vmul.f32 %v629, %v633
        %vm635 = vweird.f32 %v514
        %vm636 = vweird.f32 %v629
        %vm637 = vmor %vm635, %vm636
        %v638 = vsel %vm637, %v629, %v634
        %v639 = vrsqrt.pop %v515
        %v640 = vmul.f32 %v639, %v515
        %v641 = vmul.f32 %v640, %v639
        %v642 = vmul.f32 0.5, %v641
        %v643 = vsub.f32 1.5, %v642
        %v644 = vmul.f32 %v639, %v643
        %vm645 = vweird.f32 %v515
        %vm646 = vweird.f32 %v639
        %vm647 = vmor %vm645, %vm646
        %v648 = vsel %vm647, %v639, %v644
        %v649 = vrsqrt.pop %v516
        %v650 = vmul.f32 %v649, %v516
        %v651 = vmul.f32 %v650, %v649
        %v652 = vmul.f32 0.5, %v651
        %v653 = vsub.f32 1.5, %v652
        %v654 = vmul.f32 %v649, %v653
        %vm655 = vweird.f32 %v516
        %vm656 = vweird.f32 %v649
        %vm657 = vmor %vm655, %vm656
        %v658 = vsel %vm657, %v649, %v654
        %v659 = vrsqrt.pop %v517
        %v660 = vmul.f32 %v659, %v517
        %v661 = vmul.f32 %v660, %v659
        %v662 = vmul.f32 0.5, %v661
        %v663 = vsub.f32 1.5, %v662
        %v664 = vmul.f32 %v659, %v663
        %vm665 = vweird.f32 %v517
        %vm666 = vweird.f32 %v659
        %vm667 = vmor %vm665, %vm666
        %v668 = vsel %vm667, %v659, %v664
        %v669 = vrsqrt.pop %v518
        %v670 = vmul.f32 %v669, %v518
        %v671 = vmul.f32 %v670, %v669
        %v672 = vmul.f32 0.5, %v671
        %v673 = vsub.f32 1.5, %v672
        %v674 = vmul.f32 %v669, %v673
        %vm675 = vweird.f32 %v518
        %vm676 = vweird.f32 %v669
        %vm677 = vmor %vm675, %vm676
        %v678 = vsel %vm677, %v669, %v674
        %v679 = vmul.f32 %v416, %v528
        %v680 = vmul.f32 %v418, %v538
        %v681 = vmul.f32 %v421, %v548
        %v682 = vmul.f32 %v423, %v558
        %v683 = vmul.f32 %v426, %v568
        %v684 = vmul.f32 %v428, %v578
        %v685 = vmul.f32 %v431, %v588
        %v686 = vmul.f32 %v433, %v598
        %v687 = vmul.f32 %v436, %v608
        %v688 = vmul.f32 %v438, %v618
        %v689 = vmul.f32 %v441, %v628
        %v690 = vmul.f32 %v443, %v638
        %v691 = vmul.f32 %v446, %v648
        %v692 = vmul.f32 %v448, %v658
        %v693 = vmul.f32 %v451, %v668
        %v694 = vmul.f32 %v453, %v678
        %v695 = vlaneseq
        %v696 = vshrl.u32 %v695, 7
        %v697 = vadd.s32 %v696, 8
        %v698 = vadd.s32 %v696, 16
        %v699 = vadd.s32 %v696, 24
        %v700 = vadd.s32 %v696, 32
        %v701 = vadd.s32 %v696, 40
        %v702 = vadd.s32 %v696, 48
        %v703 = vadd.s32 %v696, 56
        %v704 = vadd.s32 %v696, 64
        %v705 = vadd.s32 %v696, 72
        %v706 = vadd.s32 %v696, 80
        %v707 = vadd.s32 %v696, 88
        %v708 = vadd.s32 %v696, 96
        %v709 = vadd.s32 %v696, 104
        %v710 = vadd.s32 %v696, 112
        %v711 = vadd.s32 %v696, 120
        %vm712 = vcmp.lt.s32.totalorder %v696, 32
        %vm713 = vcmp.lt.s32.totalorder %v697, 32
        %vm714 = vcmp.lt.s32.totalorder %v698, 32
        %vm715 = vcmp.lt.s32.totalorder %v699, 32
        %vm716 = vcmp.lt.s32.totalorder %v700, 32
        %vm717 = vcmp.lt.s32.totalorder %v701, 32
        %vm718 = vcmp.lt.s32.totalorder %v702, 32
        %vm719 = vcmp.lt.s32.totalorder %v703, 32
        %vm720 = vcmp.lt.s32.totalorder %v704, 32
        %vm721 = vcmp.lt.s32.totalorder %v705, 32
        %vm722 = vcmp.lt.s32.totalorder %v706, 32
        %vm723 = vcmp.lt.s32.totalorder %v707, 32
        %vm724 = vcmp.lt.s32.totalorder %v708, 32
        %vm725 = vcmp.lt.s32.totalorder %v709, 32
        %vm726 = vcmp.lt.s32.totalorder %v710, 32
        %vm727 = vcmp.lt.s32.totalorder %v711, 32
        %v728 = vsel %vm712, 1, 0
        %v729 = vsel %vm713, 1, 0
        %v730 = vsel %vm714, 1, 0
        %v731 = vsel %vm715, 1, 0
        %v732 = vsel %vm716, 1, 0
        %v733 = vsel %vm717, 1, 0
        %v734 = vsel %vm718, 1, 0
        %v735 = vsel %vm719, 1, 0
        %v736 = vsel %vm720, 1, 0
        %v737 = vsel %vm721, 1, 0
        %v738 = vsel %vm722, 1, 0
        %v739 = vsel %vm723, 1, 0
        %v740 = vsel %vm724, 1, 0
        %v741 = vsel %vm725, 1, 0
        %v742 = vsel %vm726, 1, 0
        %v743 = vsel %vm727, 1, 0
        %v744 = vcvt.s32.f32 %v728
        %v745 = vcvt.s32.f32 %v729
        %v746 = vcvt.s32.f32 %v730
        %v747 = vcvt.s32.f32 %v731
        %v748 = vcvt.s32.f32 %v732
        %v749 = vcvt.s32.f32 %v733
        %v750 = vcvt.s32.f32 %v734
        %v751 = vcvt.s32.f32 %v735
        %v752 = vcvt.s32.f32 %v736
        %v753 = vcvt.s32.f32 %v737
        %v754 = vcvt.s32.f32 %v738
        %v755 = vcvt.s32.f32 %v739
        %v756 = vcvt.s32.f32 %v740
        %v757 = vcvt.s32.f32 %v741
        %v758 = vcvt.s32.f32 %v742
        %v759 = vcvt.s32.f32 %v743
        %v760 = vmul.f32 %v679, %v744
        %v761 = vmul.f32 %v680, %v745
        %v762 = vmul.f32 %v681, %v746
        %v763 = vmul.f32 %v682, %v747
        %v764 = vmul.f32 %v683, %v748
        %v765 = vmul.f32 %v684, %v749
        %v766 = vmul.f32 %v685, %v750
        %v767 = vmul.f32 %v686, %v751
        %v768 = vmul.f32 %v687, %v752
        %v769 = vmul.f32 %v688, %v753
        %v770 = vmul.f32 %v689, %v754
        %v771 = vmul.f32 %v690, %v755
        %v772 = vmul.f32 %v691, %v756
        %v773 = vmul.f32 %v692, %v757
        %v774 = vmul.f32 %v693, %v758
        %v775 = vmul.f32 %v694, %v759
        %v776 = vadd.f32 %v760, %v761
        %v777 = vadd.f32 %v776, %v762
        %v778 = vadd.f32 %v777, %v763
        %v779 = vadd.f32 %v778, %v764
        %v780 = vadd.f32 %v779, %v765
        %v781 = vadd.f32 %v780, %v766
        %v782 = vadd.f32 %v781, %v767
        %v783 = vadd.f32 %v782, %v768
        %v784 = vadd.f32 %v783, %v769
        %v785 = vadd.f32 %v784, %v770
        %v786 = vadd.f32 %v785, %v771
        %v787 = vadd.f32 %v786, %v772
        %v788 = vadd.f32 %v787, %v773
        %v789 = vadd.f32 %v788, %v774
        %v790 = vadd.f32 %v789, %v775
        %v791 = vrot.slane %v790, 4
        %v792 = vadd.f32 %v790, %v791
        %v793 = vrot.slane %v792, 2
        %v794 = vadd.f32 %v792, %v793
        %v795 = vrot.slane %v794, 1
        %v796 = vadd.f32 %v794, %v795
        %v797 = vmul.f32 %v796, 0.03125
        %v798 = vsub.f32 %v760, %v797
        %v799 = vsub.f32 %v761, %v797
        %v800 = vsub.f32 %v762, %v797
        %v801 = vsub.f32 %v763, %v797
        %v802 = vsub.f32 %v764, %v797
        %v803 = vsub.f32 %v765, %v797
        %v804 = vsub.f32 %v766, %v797
        %v805 = vsub.f32 %v767, %v797
        %v806 = vsub.f32 %v768, %v797
        %v807 = vsub.f32 %v769, %v797
        %v808 = vsub.f32 %v770, %v797
        %v809 = vsub.f32 %v771, %v797
        %v810 = vsub.f32 %v772, %v797
        %v811 = vsub.f32 %v773, %v797
        %v812 = vsub.f32 %v774, %v797
        %v813 = vsub.f32 %v775, %v797
        %v814 = vmul.f32 %v798, %v744
        %v815 = vmul.f32 %v799, %v745
        %v816 = vmul.f32 %v800, %v746
        %v817 = vmul.f32 %v801, %v747
        %v818 = vmul.f32 %v802, %v748
        %v819 = vmul.f32 %v803, %v749
        %v820 = vmul.f32 %v804, %v750
        %v821 = vmul.f32 %v805, %v751
        %v822 = vmul.f32 %v806, %v752
        %v823 = vmul.f32 %v807, %v753
        %v824 = vmul.f32 %v808, %v754
        %v825 = vmul.f32 %v809, %v755
        %v826 = vmul.f32 %v810, %v756
        %v827 = vmul.f32 %v811, %v757
        %v828 = vmul.f32 %v812, %v758
        %v829 = vmul.f32 %v813, %v759
        %v830 = vmul.f32 %v814, %v814
        %v831 = vmul.f32 %v815, %v815
        %v832 = vmul.f32 %v816, %v816
        %v833 = vmul.f32 %v817, %v817
        %v834 = vmul.f32 %v818, %v818
        %v835 = vmul.f32 %v819, %v819
        %v836 = vmul.f32 %v820, %v820
        %v837 = vmul.f32 %v821, %v821
        %v838 = vmul.f32 %v822, %v822
        %v839 = vmul.f32 %v823, %v823
        %v840 = vmul.f32 %v824, %v824
        %v841 = vmul.f32 %v825, %v825
        %v842 = vmul.f32 %v826, %v826
        %v843 = vmul.f32 %v827, %v827
        %v844 = vmul.f32 %v828, %v828
        %v845 = vmul.f32 %v829, %v829
        %v846 = vadd.f32 %v830, %v831
        %v847 = vadd.f32 %v846, %v832
        %v848 = vadd.f32 %v847, %v833
        %v849 = vadd.f32 %v848, %v834
        %v850 = vadd.f32 %v849, %v835
        %v851 = vadd.f32 %v850, %v836
        %v852 = vadd.f32 %v851, %v837
        %v853 = vadd.f32 %v852, %v838
        %v854 = vadd.f32 %v853, %v839
        %v855 = vadd.f32 %v854, %v840
        %v856 = vadd.f32 %v855, %v841
        %v857 = vadd.f32 %v856, %v842
        %v858 = vadd.f32 %v857, %v843
        %v859 = vadd.f32 %v858, %v844
        %v860 = vadd.f32 %v859, %v845
        %v861 = vrot.slane %v860, 4
        %v862 = vadd.f32 %v860, %v861
        %v863 = vrot.slane %v862, 2
        %v864 = vadd.f32 %v862, %v863
        %v865 = vrot.slane %v864, 1
        %v866 = vadd.f32 %v864, %v865
        %v867 = vmul.f32 %v866, 0.03125
        %v868 = vadd.f32 %v867, 1e-05
        %v869 = vrsqrt.pop %v868
        %v870 = vmul.f32 %v869, %v868
        %v871 = vmul.f32 %v870, %v869
        %v872 = vmul.f32 0.5, %v871
        %v873 = vsub.f32 1.5, %v872
        %v874 = vmul.f32 %v869, %v873
        %vm875 = vweird.f32 %v868
        %vm876 = vweird.f32 %v869
        %vm877 = vmor %vm875, %vm876
        %v878 = vsel %vm877, %v869, %v874
        %v879 = vmul.f32 %v798, %v878
        %v880 = vmul.f32 %v799, %v878
        %v881 = vmul.f32 %v800, %v878
        %v882 = vmul.f32 %v801, %v878
        %v883 = vmul.f32 %v802, %v878
        %v884 = vmul.f32 %v803, %v878
        %v885 = vmul.f32 %v804, %v878
        %v886 = vmul.f32 %v805, %v878
        %v887 = vmul.f32 %v806, %v878
        %v888 = vmul.f32 %v807, %v878
        %v889 = vmul.f32 %v808, %v878
        %v890 = vmul.f32 %v809, %v878
        %v891 = vmul.f32 %v810, %v878
        %v892 = vmul.f32 %v811, %v878
        %v893 = vmul.f32 %v812, %v878
        %v894 = vmul.f32 %v813, %v878
        %p895 = scmp.lt.s32.totalorder %s17, 1
        %vm896 = vcmp.lt.f32.partialorder %v879, 0.0
        %vm897 = vcmp.lt.f32.partialorder %v880, 0.0
        %vm898 = vcmp.lt.f32.partialorder %v881, 0.0
        %vm899 = vcmp.lt.f32.partialorder %v882, 0.0
        %vm900 = vcmp.lt.f32.partialorder %v883, 0.0
        %vm901 = vcmp.lt.f32.partialorder %v884, 0.0
        %vm902 = vcmp.lt.f32.partialorder %v885, 0.0
        %vm903 = vcmp.lt.f32.partialorder %v886, 0.0
        %vm904 = vcmp.lt.f32.partialorder %v887, 0.0
        %vm905 = vcmp.lt.f32.partialorder %v888, 0.0
        %vm906 = vcmp.lt.f32.partialorder %v889, 0.0
        %vm907 = vcmp.lt.f32.partialorder %v890, 0.0
        %vm908 = vcmp.lt.f32.partialorder %v891, 0.0
        %vm909 = vcmp.lt.f32.partialorder %v892, 0.0
        %vm910 = vcmp.lt.f32.partialorder %v893, 0.0
        %vm911 = vcmp.lt.f32.partialorder %v894, 0.0
        %s912 = scalar_select %p895, 1, 0
        %v913 = vstv %s912
        %vm914 = vcmp.eq.s32.totalorder %v913, 1
        %vm915 = vmand %vm914, %vm896
        %vm916 = vmand %vm914, %vm897
        %vm917 = vmand %vm914, %vm898
        %vm918 = vmand %vm914, %vm899
        %vm919 = vmand %vm914, %vm900
        %vm920 = vmand %vm914, %vm901
        %vm921 = vmand %vm914, %vm902
        %vm922 = vmand %vm914, %vm903
        %vm923 = vmand %vm914, %vm904
        %vm924 = vmand %vm914, %vm905
        %vm925 = vmand %vm914, %vm906
        %vm926 = vmand %vm914, %vm907
        %vm927 = vmand %vm914, %vm908
        %vm928 = vmand %vm914, %vm909
        %vm929 = vmand %vm914, %vm910
        %vm930 = vmand %vm914, %vm911
        %v931 = vsel %vm915, 0.0, %v879
        %v932 = vsel %vm916, 0.0, %v880
        %v933 = vsel %vm917, 0.0, %v881
        %v934 = vsel %vm918, 0.0, %v882
        %v935 = vsel %vm919, 0.0, %v883
        %v936 = vsel %vm920, 0.0, %v884
        %v937 = vsel %vm921, 0.0, %v885
        %v938 = vsel %vm922, 0.0, %v886
        %v939 = vsel %vm923, 0.0, %v887
        %v940 = vsel %vm924, 0.0, %v888
        %v941 = vsel %vm925, 0.0, %v889
        %v942 = vsel %vm926, 0.0, %v890
        %v943 = vsel %vm927, 0.0, %v891
        %v944 = vsel %vm928, 0.0, %v892
        %v945 = vsel %vm929, 0.0, %v893
        %v946 = vsel %vm930, 0.0, %v894
        %v947 = vmul.f32 %v931, %v744
        %v948 = vmul.f32 %v932, %v745
        %v949 = vmul.f32 %v933, %v746
        %v950 = vmul.f32 %v934, %v747
        %v951 = vmul.f32 %v935, %v748
        %v952 = vmul.f32 %v936, %v749
        %v953 = vmul.f32 %v937, %v750
        %v954 = vmul.f32 %v938, %v751
        %v955 = vmul.f32 %v939, %v752
        %v956 = vmul.f32 %v940, %v753
        %v957 = vmul.f32 %v941, %v754
        %v958 = vmul.f32 %v942, %v755
        %v959 = vmul.f32 %v943, %v756
        %v960 = vmul.f32 %v944, %v757
        %v961 = vmul.f32 %v945, %v758
        %v962 = vmul.f32 %v946, %v759
        %v963 = vpack.c.bf16 %v947, %v947
        %v964 = vpack.c.bf16 %v948, %v948
        %v965 = vpack.c.bf16 %v949, %v949
        %v966 = vpack.c.bf16 %v950, %v950
        %v967 = vpack.c.bf16 %v951, %v951
        %v968 = vpack.c.bf16 %v952, %v952
        %v969 = vpack.c.bf16 %v953, %v953
        %v970 = vpack.c.bf16 %v954, %v954
        %v971 = vpack.c.bf16 %v955, %v955
        %v972 = vpack.c.bf16 %v956, %v956
        %v973 = vpack.c.bf16 %v957, %v957
        %v974 = vpack.c.bf16 %v958, %v958
        %v975 = vpack.c.bf16 %v959, %v959
        %v976 = vpack.c.bf16 %v960, %v960
        %v977 = vpack.c.bf16 %v961, %v961
        %v978 = vpack.c.bf16 %v962, %v962
        %979 = vst [vmem:[#allocation2] sm:$0xf] %v963
        %980 = vst [vmem:[#allocation2 + $0x4] sm:$0xf] %v964
        %981 = vst [vmem:[#allocation2 + $0x8] sm:$0xf] %v965
        %982 = vst [vmem:[#allocation2 + $0xc] sm:$0xf] %v966
        %983 = vst [vmem:[#allocation2 + $0x10] sm:$0xf] %v967
        %984 = vst [vmem:[#allocation2 + $0x14] sm:$0xf] %v968
        %985 = vst [vmem:[#allocation2 + $0x18] sm:$0xf] %v969
        %986 = vst [vmem:[#allocation2 + $0x1c] sm:$0xf] %v970
        %987 = vst [vmem:[#allocation2 + $0x20] sm:$0xf] %v971
        %988 = vst [vmem:[#allocation2 + $0x24] sm:$0xf] %v972
        %989 = vst [vmem:[#allocation2 + $0x28] sm:$0xf] %v973
        %990 = vst [vmem:[#allocation2 + $0x2c] sm:$0xf] %v974
        %991 = vst [vmem:[#allocation2 + $0x30] sm:$0xf] %v975
        %992 = vst [vmem:[#allocation2 + $0x34] sm:$0xf] %v976
        %993 = vst [vmem:[#allocation2 + $0x38] sm:$0xf] %v977
        %994 = vst [vmem:[#allocation2 + $0x3c] sm:$0xf] %v978
        %p995 = scmp.eq.s32.totalorder %s17, 1
        // Predicated region
        $region49: #{tpu_custom_call.1} parent=31 // pred_check
          %p996 = pneg %p995
        $region50: #{tpu_custom_call.1} parent=31 // pred_check_branch
          %998 = sbr.rel (%p996) target = $region52
        $region51: #{tpu_custom_call.1} parent=31 // pred_region
          %999 = vst [vmem:[#allocation9] sm:$0xff] %v947
          %1000 = vst [vmem:[#allocation9 + $0x8] sm:$0xff] %v948
          %1001 = vst [vmem:[#allocation9 + $0x10] sm:$0xff] %v949
          %1002 = vst [vmem:[#allocation9 + $0x18] sm:$0xff] %v950
          %1003 = vst [vmem:[#allocation9 + $0x20] sm:$0xff] %v951
          %1004 = vst [vmem:[#allocation9 + $0x28] sm:$0xff] %v952
          %1005 = vst [vmem:[#allocation9 + $0x30] sm:$0xff] %v953
          %1006 = vst [vmem:[#allocation9 + $0x38] sm:$0xff] %v954
          %1007 = vst [vmem:[#allocation9 + $0x40] sm:$0xff] %v955
          %1008 = vst [vmem:[#allocation9 + $0x48] sm:$0xff] %v956
          %1009 = vst [vmem:[#allocation9 + $0x50] sm:$0xff] %v957
          %1010 = vst [vmem:[#allocation9 + $0x58] sm:$0xff] %v958
          %1011 = vst [vmem:[#allocation9 + $0x60] sm:$0xff] %v959
          %1012 = vst [vmem:[#allocation9 + $0x68] sm:$0xff] %v960
          %1013 = vst [vmem:[#allocation9 + $0x70] sm:$0xff] %v961
          %1014 = vst [vmem:[#allocation9 + $0x78] sm:$0xff] %v962
        $region52: #{tpu_custom_call.1} parent=31 // pred_fallthru
          _
        // Predicated region
        $region53: #{tpu_custom_call.1} parent=31 // pred_check
          %p1015 = pneg %p98
        $region54: #{tpu_custom_call.1} parent=31 // pred_check_branch
          %1017 = sbr.rel (%p1015) target = $region56
        $region55: #{tpu_custom_call.1} parent=31 // pred_region
          %1019 = vsyncadd [#allocation5], 0
          %s1020 = sshll.u32 [#allocation9], 4
          %s1021 = int_to_ptr.vmem [resolvable:$true] %s1020
          %s1022 = sshll.u32 %s3, 4
          %s1023 = int_to_ptr.hbm [resolvable:$true] %s1022
          %1028 = dma.vmem_to_hbm [thread:$0]  %s1021, 2048, %s1023, [#allocation5], 128, 128, 8
        $region56: #{tpu_custom_call.1} parent=31 // pred_fallthru
          _
        // Predicated region
        $region57: #{tpu_custom_call.1} parent=31 // pred_check
          %p1029 = pneg %p98
        $region58: #{tpu_custom_call.1} parent=31 // pred_check_branch
          %1031 = sbr.rel (%p1029) target = $region60
        $region59: #{tpu_custom_call.1} parent=31 // pred_region
          %1033 = dma.done [#allocation5], 2048
        $region60: #{tpu_custom_call.1} parent=31 // pred_fallthru
          _
      $region32: #{tpu_custom_call.1} parent=5 // pred_fallthru
        _
      %p1034 = scmp.le.s32.totalorder 2, %s12
      // Predicated region
      $region61: #{tpu_custom_call.1} parent=5 // pred_check
        %p1035 = pneg %p1034
      $region62: #{tpu_custom_call.1} parent=5 // pred_check_branch
        %1037 = sbr.rel (%p1035) target = $region64
      $region63: #{tpu_custom_call.1} parent=5 // pred_region
        %s1038 = ssub.s32 %s12, 2
      $region64: #{tpu_custom_call.1} parent=5 // pred_fallthru
        _
    $region6: #{tpu_custom_call.1} parent=1 // loop_footer
      %s16 = sadd.s32 1, %s12
    $region7: #{tpu_custom_call.1} parent=1 // loop_footer_branch
      %11 = sbr.rel target = $region3
    $region8: #{tpu_custom_call.1} parent=1 // loop_exit
      _
    %1039 = vsyncpa [#allocation4], 1
    %s1040 = scalar_lea.sflag [#allocation4], 1
    %1041 = vsyncpa %s1040, 1
    %1042 = vsyncpa [#allocation7], 1
    %1043 = vsyncpa [#allocation5], 1
    %s1044 = scalar_lea.sflag [#allocation5], 1
    %1045 = vsyncpa %s1044, 1

</llo_original>
